<compile_context>
chip_gen: v7x
topology: tpu7x:2x2x1
jax: 0.10.0
libtpu: 0.0.40
codegen_flags: <defaults>
</compile_context>

<pallas_src>
import jax
import jax.numpy as jnp
from jax.experimental import pallas as pl
from jax.experimental.pallas import tpu as pltpu

BN_EPS = 1e-5
LANE = 128                    # TPU lane width: hidden feature dims padded to this
DEFAULT_BLOCK_BATCH = 2048    # max batch rows per grid step (well within VMEM limits)


def _round_up(n, m):
    return ((n + m - 1) // m) * m


_SQRT_2_OVER_PI = 0.7978845608028654


def _gelu_tanh(x):
    # tanh-approximate GELU (EUP-friendly); f32 math, cast to bf16 only at dot inputs.
    # TODO(synk): torch nn.GELU() default is the exact erf form; tanh approx deviates
    # by <~3e-3 absolute, absorbed by the test tolerance below.
    return 0.5 * x * (1.0 + jnp.tanh(_SQRT_2_OVER_PI * (x + 0.044715 * x * x * x)))


def _gelu_exact(x):
    # exact (erf-based) GELU, matching torch.nn.GELU() default — reference only.
    return 0.5 * x * (1.0 + jax.lax.erf(x * 0.7071067811865475))


def ff_kernel(x_ref, w0_ref, b0_ref, w1_ref, b1_ref, wf_ref, bf_ref, out_ref):
    """One batch tile of: GELU(x@W0'+b0') -> GELU(.@W1'+b1') -> .@Wf+bf.

    BatchNorm (eval, running stats) and the Linear bias are pre-folded into
    (W', b') on the host; weights arrive as bf16, accumulation/bias/GELU are f32.
    Dropout is identity in eval mode. Padded lanes carry exact zeros
    (zero weights/bias -> GELU(0)=0), so they never pollute downstream matmuls.
    """
    h = x_ref[...].astype(jnp.bfloat16)
    h = jnp.dot(h, w0_ref[...], preferred_element_type=jnp.float32) + b0_ref[...]
    h = _gelu_tanh(h).astype(jnp.bfloat16)
    h = jnp.dot(h, w1_ref[...], preferred_element_type=jnp.float32) + b1_ref[...]
    h = _gelu_tanh(h).astype(jnp.bfloat16)
    out_ref[...] = jnp.dot(h, wf_ref[...], preferred_element_type=jnp.float32) + bf_ref[...]


def tunable_ff_forward(x, kp, *, block_batch=DEFAULT_BLOCK_BATCH):
    """Run the fused MLP kernel. x: [batch, input_dim] float32.

    kp holds folded + padded parameters (see fold_and_pad_params). The batch is
    split evenly into >= 1 (>= 2 when batch >= 16, for v7x dual-TC) grid steps of
    `tb` rows each; rows are zero-padded only by the small amount needed to make
    the even split a multiple of 8 sublanes.
    """
    batch, in_dim = x.shape
    out_dim = kp["wf"].shape[1]

    # Even batch split: avoids up to ~2x padding waste vs. padding to a tile multiple.
    n_steps = pl.cdiv(batch, block_batch)
    if batch >= 16:
        n_steps = max(n_steps, 2)         # v7x: >= 2 grid steps so both TCs get work
    tb = _round_up(pl.cdiv(batch, n_steps), 8)
    pb = n_steps * tb
    if pb != batch:
        x = jnp.pad(x, ((0, pb - batch), (0, 0)))

    const2 = lambda i: (0, 0)  # weights: same (full) block every grid step -> not re-DMA'd
    weight_names = ("w0", "b0", "w1", "b1", "wf", "bf")
    weight_specs = [pl.BlockSpec(kp[name].shape, const2) for name in weight_names]

    h0 = kp["w0"].shape[1]
    h1 = kp["w1"].shape[1]
    cost = pl.CostEstimate(
        flops=2 * pb * (in_dim * h0 + h0 * h1 + h1 * out_dim),
        transcendentals=pb * (h0 + h1),                      # one tanh per hidden unit
        bytes_accessed=(pb * in_dim * 4
                        + sum(int(kp[n].size) * kp[n].dtype.itemsize for n in weight_names)
                        + pb * out_dim * 4),
    )

    out = pl.pallas_call(
        ff_kernel,
        out_shape=jax.ShapeDtypeStruct((pb, out_dim), jnp.float32),
        grid=(pb // tb,),
        in_specs=[pl.BlockSpec((tb, in_dim), lambda i: (i, 0))] + weight_specs,
        # Narrow output block: last dim equals the full array dim (legal), stores are
        # masked but HBM writeback drops from 512 B/row (padded f32) to 32 B/row.
        out_specs=pl.BlockSpec((tb, out_dim), lambda i: (i, 0)),
        compiler_params=pltpu.CompilerParams(
            dimension_semantics=("parallel",),      # v7x: shard batch tiles across 2 TCs
            vmem_limit_bytes=32 * 1024 * 1024),
        cost_estimate=cost,
    )(x, *(kp[name] for name in weight_names))

    return out if pb == batch else out[:batch]


# ----------------------------- parameters -----------------------------------

def xavier_uniform(key, fan_in, fan_out):
    bound = (6.0 / (fan_in + fan_out)) ** 0.5
    # stored as [in, out] (PyTorch weight transposed), same xavier bound
    return jax.random.uniform(key, (fan_in, fan_out), jnp.float32, -bound, bound)


def make_params(key, input_dim, hidden, output_dim):
    """Raw parameters matching the PyTorch module's init (Linear xavier/zeros, BN defaults)."""
    dims = [input_dim] + hidden
    keys = jax.random.split(key, len(hidden) + 1)
    p = {}
    for i, (din, dout) in enumerate(zip(dims[:-1], dims[1:])):
        p[f"w{i}"] = xavier_uniform(keys[i], din, dout)
        p[f"b{i}"] = jnp.zeros((1, dout), jnp.float32)          # Linear bias
        p[f"g{i}"] = jnp.ones((1, dout), jnp.float32)           # BN gamma
        p[f"be{i}"] = jnp.zeros((1, dout), jnp.float32)         # BN beta
        p[f"m{i}"] = jnp.zeros((1, dout), jnp.float32)          # BN running_mean
        p[f"v{i}"] = jnp.ones((1, dout), jnp.float32)           # BN running_var
    p["wf"] = xavier_uniform(keys[-1], dims[-1], output_dim)
    p["bf"] = jnp.zeros((1, output_dim), jnp.float32)
    return p


def fold_and_pad_params(p, input_dim, output_dim):
    """Host-side constant folding + padding (fixed trial: 2 hidden layers).

    Fold eval-mode BN into the preceding Linear:
        s  = gamma * rsqrt(running_var + eps)
        W' = W * s            (scale each output column)
        b' = (b - mean) * s + beta
    Hidden feature dims are zero-padded to LANE=128 so hidden-layer matmuls and
    intermediate activations are lane-dense (padded lanes compute exact zeros);
    the final weight keeps its narrow output_dim so the HBM writeback is small.
    Weights are cast to bf16 for native MXU passes; biases stay f32 (f32 epilogue).
    """
    def fold(i):
        s = p[f"g{i}"] * jax.lax.rsqrt(p[f"v{i}"] + BN_EPS)     # [1, out]
        return p[f"w{i}"] * s, (p[f"b{i}"] - p[f"m{i}"]) * s + p[f"be{i}"]

    def pad_to(a, rows, cols):
        return jnp.pad(a, ((0, rows - a.shape[0]), (0, cols - a.shape[1])))

    w0, b0 = fold(0)
    w1, b1 = fold(1)
    kp = {
        "w0": pad_to(w0, input_dim, LANE).astype(jnp.bfloat16),
        "b0": pad_to(b0, 1, LANE),
        "w1": pad_to(w1, LANE, LANE).astype(jnp.bfloat16),
        "b1": pad_to(b1, 1, LANE),
        "wf": pad_to(p["wf"], LANE, output_dim).astype(jnp.bfloat16),
        "bf": p["bf"],
    }
    return kp


# ----------------------------- reference ------------------------------------

def reference_forward(x, p, n_hidden):
    """Pure-JAX reference in the original module form: Linear -> BN(eval) -> exact GELU."""
    h = x
    for i in range(n_hidden):
        h = h @ p[f"w{i}"] + p[f"b{i}"]
        h = (h - p[f"m{i}"]) * jax.lax.rsqrt(p[f"v{i}"] + BN_EPS) * p[f"g{i}"] + p[f"be{i}"]
        h = _gelu_exact(h)
    return h @ p["wf"] + p["bf"]


if __name__ == "__main__":
    batch, input_dim, output_dim = 16, 64, 8
    hidden = [64, 32]          # trial: n_hidden=2, hidden_units_0=64, hidden_units_1=32

    root = jax.random.PRNGKey(0)
    kx, kparam = jax.random.split(root)
    x = jax.random.normal(kx, (batch, input_dim), jnp.float32)

    raw_params = make_params(kparam, input_dim, hidden, output_dim)
    kernel_params = fold_and_pad_params(raw_params, input_dim, output_dim)

    out = tunable_ff_forward(x, kernel_params)
    out = jax.block_until_ready(out)

    # TODO(synk): training-mode Dropout / batch-stat BatchNorm not reproduced (eval-mode forward).
    ref = reference_forward(x, raw_params, n_hidden=len(hidden))
    assert out.shape == (batch, output_dim)
    # Tolerance accounts for (a) bf16 matmul operands with f32 accumulation (vs. the
    # reference's default multi-pass f32 matmul), (b) BN folded into weights before the
    # bf16 cast, and (c) tanh-approximate vs. exact GELU.
    assert jnp.allclose(out, ref, atol=3e-2, rtol=3e-2), "mismatch vs JAX reference"

    print("KERNEL_OK")
</pallas_src>

<mosaic_0001>
module attributes {stable_mosaic.version = 11 : i64} {
  func.func @ff_kernel(%arg0: i32, %arg1: memref<8x64xf32, #tpu.memory_space<vmem>>, %arg2: memref<64x128xbf16, #tpu.memory_space<vmem>>, %arg3: memref<1x128xf32, #tpu.memory_space<vmem>>, %arg4: memref<128x128xbf16, #tpu.memory_space<vmem>>, %arg5: memref<1x128xf32, #tpu.memory_space<vmem>>, %arg6: memref<128x8xbf16, #tpu.memory_space<vmem>>, %arg7: memref<1x8xf32, #tpu.memory_space<vmem>>, %arg8: memref<8x8xf32, #tpu.memory_space<vmem>>) attributes {dimension_semantics = [#tpu.dimension_semantics<parallel>], iteration_bounds = array<i64: 2>, scalar_prefetch = 0 : i64, scratch_operands = 0 : i64, tpu.core_type = #tpu.core_type<tc>, window_params = [{transform_indices = @transform_0, window_bounds = array<i64: 8, 64>}, {pipeline_mode = #tpu.pipeline_mode<synchronous>, transform_indices = @transform_1, window_bounds = array<i64: 64, 128>}, {pipeline_mode = #tpu.pipeline_mode<synchronous>, transform_indices = @transform_2, window_bounds = array<i64: 1, 128>}, {pipeline_mode = #tpu.pipeline_mode<synchronous>, transform_indices = @transform_3, window_bounds = array<i64: 128, 128>}, {pipeline_mode = #tpu.pipeline_mode<synchronous>, transform_indices = @transform_4, window_bounds = array<i64: 1, 128>}, {pipeline_mode = #tpu.pipeline_mode<synchronous>, transform_indices = @transform_5, window_bounds = array<i64: 128, 8>}, {pipeline_mode = #tpu.pipeline_mode<synchronous>, transform_indices = @transform_6, window_bounds = array<i64: 1, 8>}, {transform_indices = @transform_7, window_bounds = array<i64: 8, 8>}]} {
    %c0 = arith.constant 0 : index
    %c0_0 = arith.constant 0 : index
    %0 = vector.load %arg1[%c0, %c0_0] : memref<8x64xf32, #tpu.memory_space<vmem>>, vector<8x64xf32>
    %1 = arith.truncf %0 : vector<8x64xf32> to vector<8x64xbf16>
    %c0_1 = arith.constant 0 : index
    %c0_2 = arith.constant 0 : index
    %2 = vector.load %arg2[%c0_1, %c0_2] : memref<64x128xbf16, #tpu.memory_space<vmem>>, vector<64x128xbf16>
    %cst = arith.constant dense<0.000000e+00> : vector<8x128xf32>
    %3 = tpu.matmul %1, %2, %cst {dimension_numbers = #tpu.dot_dimension_numbers<[1], [0], [0], [1], [0, 0, 1, 1], [], []>} : vector<8x64xbf16>, vector<64x128xbf16>, vector<8x128xf32> -> vector<8x128xf32>
    %c0_3 = arith.constant 0 : index
    %c0_4 = arith.constant 0 : index
    %4 = vector.load %arg3[%c0_3, %c0_4] : memref<1x128xf32, #tpu.memory_space<vmem>>, vector<1x128xf32>
    %5 = vector.broadcast %4 : vector<1x128xf32> to vector<8x128xf32>
    %6 = arith.addf %3, %5 : vector<8x128xf32>
    %cst_5 = arith.constant 5.000000e-01 : f32
    %7 = vector.broadcast %cst_5 : f32 to vector<8x128xf32>
    %8 = arith.mulf %7, %6 : vector<8x128xf32>
    %cst_6 = arith.constant 4.471500e-02 : f32
    %9 = vector.broadcast %cst_6 : f32 to vector<8x128xf32>
    %10 = arith.mulf %9, %6 : vector<8x128xf32>
    %11 = arith.mulf %10, %6 : vector<8x128xf32>
    %12 = arith.mulf %11, %6 : vector<8x128xf32>
    %13 = arith.addf %6, %12 : vector<8x128xf32>
    %cst_7 = arith.constant 0.797884583 : f32
    %14 = vector.broadcast %cst_7 : f32 to vector<8x128xf32>
    %15 = arith.mulf %14, %13 : vector<8x128xf32>
    %16 = math.tanh %15 : vector<8x128xf32>
    %cst_8 = arith.constant 1.000000e+00 : f32
    %17 = vector.broadcast %cst_8 : f32 to vector<8x128xf32>
    %18 = arith.addf %17, %16 : vector<8x128xf32>
    %19 = arith.mulf %8, %18 : vector<8x128xf32>
    %20 = arith.truncf %19 : vector<8x128xf32> to vector<8x128xbf16>
    %c0_9 = arith.constant 0 : index
    %c0_10 = arith.constant 0 : index
    %21 = vector.load %arg4[%c0_9, %c0_10] : memref<128x128xbf16, #tpu.memory_space<vmem>>, vector<128x128xbf16>
    %cst_11 = arith.constant dense<0.000000e+00> : vector<8x128xf32>
    %22 = tpu.matmul %20, %21, %cst_11 {dimension_numbers = #tpu.dot_dimension_numbers<[1], [0], [0], [1], [0, 0, 1, 1], [], []>} : vector<8x128xbf16>, vector<128x128xbf16>, vector<8x128xf32> -> vector<8x128xf32>
    %c0_12 = arith.constant 0 : index
    %c0_13 = arith.constant 0 : index
    %23 = vector.load %arg5[%c0_12, %c0_13] : memref<1x128xf32, #tpu.memory_space<vmem>>, vector<1x128xf32>
    %24 = vector.broadcast %23 : vector<1x128xf32> to vector<8x128xf32>
    %25 = arith.addf %22, %24 : vector<8x128xf32>
    %cst_14 = arith.constant 5.000000e-01 : f32
    %26 = vector.broadcast %cst_14 : f32 to vector<8x128xf32>
    %27 = arith.mulf %26, %25 : vector<8x128xf32>
    %cst_15 = arith.constant 4.471500e-02 : f32
    %28 = vector.broadcast %cst_15 : f32 to vector<8x128xf32>
    %29 = arith.mulf %28, %25 : vector<8x128xf32>
    %30 = arith.mulf %29, %25 : vector<8x128xf32>
    %31 = arith.mulf %30, %25 : vector<8x128xf32>
    %32 = arith.addf %25, %31 : vector<8x128xf32>
    %cst_16 = arith.constant 0.797884583 : f32
    %33 = vector.broadcast %cst_16 : f32 to vector<8x128xf32>
    %34 = arith.mulf %33, %32 : vector<8x128xf32>
    %35 = math.tanh %34 : vector<8x128xf32>
    %cst_17 = arith.constant 1.000000e+00 : f32
    %36 = vector.broadcast %cst_17 : f32 to vector<8x128xf32>
    %37 = arith.addf %36, %35 : vector<8x128xf32>
    %38 = arith.mulf %27, %37 : vector<8x128xf32>
    %39 = arith.truncf %38 : vector<8x128xf32> to vector<8x128xbf16>
    %c0_18 = arith.constant 0 : index
    %c0_19 = arith.constant 0 : index
    %40 = vector.load %arg6[%c0_18, %c0_19] : memref<128x8xbf16, #tpu.memory_space<vmem>>, vector<128x8xbf16>
    %cst_20 = arith.constant dense<0.000000e+00> : vector<8x8xf32>
    %41 = tpu.matmul %39, %40, %cst_20 {dimension_numbers = #tpu.dot_dimension_numbers<[1], [0], [0], [1], [0, 0, 1, 1], [], []>} : vector<8x128xbf16>, vector<128x8xbf16>, vector<8x8xf32> -> vector<8x8xf32>
    %c0_21 = arith.constant 0 : index
    %c0_22 = arith.constant 0 : index
    %42 = vector.load %arg7[%c0_21, %c0_22] : memref<1x8xf32, #tpu.memory_space<vmem>>, vector<1x8xf32>
    %43 = vector.broadcast %42 : vector<1x8xf32> to vector<8x8xf32>
    %44 = arith.addf %41, %43 : vector<8x8xf32>
    %c0_23 = arith.constant 0 : index
    %c0_24 = arith.constant 0 : index
    %45 = vector.load %arg8[%c0_23, %c0_24] : memref<8x8xf32, #tpu.memory_space<vmem>>, vector<8x8xf32>
    tpu.vector_store %arg8[%c0_23, %c0_24], %44 {strides = array<i32>} : memref<8x8xf32, #tpu.memory_space<vmem>>, vector<8x8xf32>,
    return
  }
  func.func @transform_0(%arg0: i32) -> (i32, i32) {
    %c0_i32 = arith.constant 0 : i32
    %c0_i32_0 = arith.constant 0 : i32
    return %arg0, %c0_i32 : i32, i32
  }
  func.func @transform_1(%arg0: i32) -> (i32, i32) {
    %c0_i32 = arith.constant 0 : i32
    %c0_i32_0 = arith.constant 0 : i32
    %c0_i32_1 = arith.constant 0 : i32
    return %c0_i32, %c0_i32_0 : i32, i32
  }
  func.func @transform_2(%arg0: i32) -> (i32, i32) {
    %c0_i32 = arith.constant 0 : i32
    %c0_i32_0 = arith.constant 0 : i32
    %c0_i32_1 = arith.constant 0 : i32
    return %c0_i32, %c0_i32_0 : i32, i32
  }
  func.func @transform_3(%arg0: i32) -> (i32, i32) {
    %c0_i32 = arith.constant 0 : i32
    %c0_i32_0 = arith.constant 0 : i32
    %c0_i32_1 = arith.constant 0 : i32
    return %c0_i32, %c0_i32_0 : i32, i32
  }
  func.func @transform_4(%arg0: i32) -> (i32, i32) {
    %c0_i32 = arith.constant 0 : i32
    %c0_i32_0 = arith.constant 0 : i32
    %c0_i32_1 = arith.constant 0 : i32
    return %c0_i32, %c0_i32_0 : i32, i32
  }
  func.func @transform_5(%arg0: i32) -> (i32, i32) {
    %c0_i32 = arith.constant 0 : i32
    %c0_i32_0 = arith.constant 0 : i32
    %c0_i32_1 = arith.constant 0 : i32
    return %c0_i32, %c0_i32_0 : i32, i32
  }
  func.func @transform_6(%arg0: i32) -> (i32, i32) {
    %c0_i32 = arith.constant 0 : i32
    %c0_i32_0 = arith.constant 0 : i32
    %c0_i32_1 = arith.constant 0 : i32
    return %c0_i32, %c0_i32_0 : i32, i32
  }
  func.func @transform_7(%arg0: i32) -> (i32, i32) {
    %c0_i32 = arith.constant 0 : i32
    %c0_i32_0 = arith.constant 0 : i32
    return %arg0, %c0_i32 : i32, i32
  }
}

</mosaic_0001>

<llo_original>
// kernel: tpu_custom_call.1
$region0: #{tpu_custom_call.1}
  #allocation0 [shape = 'u32[]', space=smem, size = 0x4, offset = 0x4, fixed_abs, tag = 'smem constant byte address 0x4 - core index']
  #allocation1 [shape = 'u32[144,128]{1,0:T(1,128)}', space=vmem, size = 0x12000, scoped, tag = 'internal scratch']
  %s0 = inlined_call_operand.hbm [shape: f32[16,64], index: 0, kind: input, shape index: {}]
  %s1 = inlined_call_operand.hbm [shape: bf16[64,128], index: 1, kind: input, shape index: {}]
  %s2 = inlined_call_operand.vmem [shape: f32[1,128], index: 2, kind: input, shape index: {}]
  %s3 = inlined_call_operand.vmem [shape: bf16[128,128], index: 3, kind: input, shape index: {}]
  %s4 = inlined_call_operand.vmem [shape: f32[1,128], index: 4, kind: input, shape index: {}]
  %s5 = inlined_call_operand.vmem [shape: bf16[128,8], index: 5, kind: input, shape index: {}]
  %s6 = inlined_call_operand.vmem [shape: f32[1,8], index: 6, kind: input, shape index: {}]
  %s7 = inlined_call_operand.vmem [shape: f32[16,8], index: 7, kind: output, shape index: {}]
  %s8 = sld [smem:[#allocation0]]
  $region69: #{tpu_custom_call.1} parent=0
    _
  %s10 = ssub.s32 1, %s8
  %s11 = scalar_select 0, %s10, %s8
  $region1: #{tpu_custom_call.1} parent=0
    #allocation2 [shape = 'u8[8192]{0}', space=vmem, size = 0x2000, scoped, tag = 'input window, operand 0']
    #allocation3 [shape = 's32[2]{0}', space=sflag, size = 0x8, scoped, tag = 'scoped memory for tpu_custom_call.1']
    #allocation4 [shape = 'u8[16384]{0}', space=vmem, size = 0x4000, scoped, tag = 'input window, operand 1, single buffered']
    #allocation5 [shape = 's32[1]{0}', space=sflag, size = 0x4, scoped, tag = 'scoped memory for tpu_custom_call.1']
    %12 = vsyncpa [#allocation3], 0
    %s13 = scalar_lea.sflag [#allocation3], 1
    %14 = vsyncpa %s13, 0
    %15 = vsyncpa [#allocation5], 0
    loop: start=0, step=1, limit=4
    $region2: #{tpu_custom_call.1} parent=1 // loop_pre_header
      _
    $region3: #{tpu_custom_call.1} parent=1 // loop_header
      %s17 = sphi 0, %s21
      %p18 = scmp.ge.s32.totalorder %s17, 4
      %s27 = sphi 0, %s29
      %s30 = sphi 0, %s27
      %s31 = sphi 0, %s30
      %s47 = sphi 0, %s31
      %s51 = sphi 0, %s51
      %s53 = sphi 0, %s51
      %s54 = sphi 0, %s53
      %s68 = sphi 0, %s54
      %s72 = sphi 0, %s72
      %s74 = sphi 0, %s72
      %s75 = sphi 0, %s74
      %s89 = sphi 0, %s75
      %s93 = sphi 0, %s93
      %s95 = sphi 0, %s93
      %s96 = sphi 0, %s95
      %s110 = sphi 0, %s96
      %s114 = sphi 0, %s114
      %s116 = sphi 0, %s114
      %s117 = sphi 0, %s116
      %s131 = sphi 0, %s117
      %s135 = sphi 0, %s135
      %s137 = sphi 0, %s135
      %s138 = sphi 0, %s137
      %s152 = sphi 0, %s138
      %s156 = sphi 0, %s156
      %s158 = sphi 0, %s156
      %s159 = sphi 0, %s158
      %s173 = sphi 0, %s159
      %s179 = sphi 0, %s181
      %s182 = sphi 0, %s179
      %s183 = sphi 0, %s182
      %s199 = sphi 0, %s183
    $region4: #{tpu_custom_call.1} parent=1 // loop_header_branch
      %20 = sbr.rel (%p18) target = $region8
    $region5: #{tpu_custom_call.1} parent=1 // loop_body
      %s22 = ssub.s32 %s17, 1
      %s23 = ssub.s32 %s17, 2
      %s24 = sadd.s32 %s17, 1
      %s25 = ssub.s32 %s17, %s24
      %p26 = scmp.eq.s32.totalorder %s25, 0
      %s28 = sadd.s32 %s27, 1
      %s29 = scalar_select %p26, %s27, %s28
      %p32 = pneg %p26
      %p33 = scmp.eq.s32.totalorder %s17, 1
      %p34 = por %p32, %p33
      %p35 = scmp.ne.s32.totalorder %s27, %s30
      %p36 = scmp.eq.s32.totalorder %s17, 0
      %p37 = por %p35, %p36
      %p38 = scmp.ne.s32.totalorder %s27, %s30
      %p39 = scmp.eq.s32.totalorder %s22, 1
      %p40 = por %p38, %p39
      %p41 = scmp.ne.s32.totalorder %s30, %s31
      %p42 = scmp.eq.s32.totalorder %s22, 0
      %p43 = por %p41, %p42
      %p44 = scmp.ne.s32.totalorder %s30, %s31
      %p45 = scmp.eq.s32.totalorder %s23, 1
      %p46 = por %p44, %p45
      %p48 = scmp.ne.s32.totalorder %s31, %s47
      %p49 = scmp.eq.s32.totalorder %s23, 0
      %p50 = por %p48, %p49
      %s52 = sadd.s32 %s51, 1
      %p55 = scmp.eq.s32.totalorder %s17, 1
      %p56 = scmp.ne.s32.totalorder %s51, %s53
      %p57 = scmp.eq.s32.totalorder %s17, 0
      %p58 = por %p56, %p57
      %p59 = scmp.ne.s32.totalorder %s51, %s53
      %p60 = scmp.eq.s32.totalorder %s22, 1
      %p61 = por %p59, %p60
      %p62 = scmp.ne.s32.totalorder %s53, %s54
      %p63 = scmp.eq.s32.totalorder %s22, 0
      %p64 = por %p62, %p63
      %p65 = scmp.ne.s32.totalorder %s53, %s54
      %p66 = scmp.eq.s32.totalorder %s23, 1
      %p67 = por %p65, %p66
      %p69 = scmp.ne.s32.totalorder %s54, %s68
      %p70 = scmp.eq.s32.totalorder %s23, 0
      %p71 = por %p69, %p70
      %s73 = sadd.s32 %s72, 1
      %p76 = scmp.eq.s32.totalorder %s17, 1
      %p77 = scmp.ne.s32.totalorder %s72, %s74
      %p78 = scmp.eq.s32.totalorder %s17, 0
      %p79 = por %p77, %p78
      %p80 = scmp.ne.s32.totalorder %s72, %s74
      %p81 = scmp.eq.s32.totalorder %s22, 1
      %p82 = por %p80, %p81
      %p83 = scmp.ne.s32.totalorder %s74, %s75
      %p84 = scmp.eq.s32.totalorder %s22, 0
      %p85 = por %p83, %p84
      %p86 = scmp.ne.s32.totalorder %s74, %s75
      %p87 = scmp.eq.s32.totalorder %s23, 1
      %p88 = por %p86, %p87
      %p90 = scmp.ne.s32.totalorder %s75, %s89
      %p91 = scmp.eq.s32.totalorder %s23, 0
      %p92 = por %p90, %p91
      %s94 = sadd.s32 %s93, 1
      %p97 = scmp.eq.s32.totalorder %s17, 1
      %p98 = scmp.ne.s32.totalorder %s93, %s95
      %p99 = scmp.eq.s32.totalorder %s17, 0
      %p100 = por %p98, %p99
      %p101 = scmp.ne.s32.totalorder %s93, %s95
      %p102 = scmp.eq.s32.totalorder %s22, 1
      %p103 = por %p101, %p102
      %p104 = scmp.ne.s32.totalorder %s95, %s96
      %p105 = scmp.eq.s32.totalorder %s22, 0
      %p106 = por %p104, %p105
      %p107 = scmp.ne.s32.totalorder %s95, %s96
      %p108 = scmp.eq.s32.totalorder %s23, 1
      %p109 = por %p107, %p108
      %p111 = scmp.ne.s32.totalorder %s96, %s110
      %p112 = scmp.eq.s32.totalorder %s23, 0
      %p113 = por %p111, %p112
      %s115 = sadd.s32 %s114, 1
      %p118 = scmp.eq.s32.totalorder %s17, 1
      %p119 = scmp.ne.s32.totalorder %s114, %s116
      %p120 = scmp.eq.s32.totalorder %s17, 0
      %p121 = por %p119, %p120
      %p122 = scmp.ne.s32.totalorder %s114, %s116
      %p123 = scmp.eq.s32.totalorder %s22, 1
      %p124 = por %p122, %p123
      %p125 = scmp.ne.s32.totalorder %s116, %s117
      %p126 = scmp.eq.s32.totalorder %s22, 0
      %p127 = por %p125, %p126
      %p128 = scmp.ne.s32.totalorder %s116, %s117
      %p129 = scmp.eq.s32.totalorder %s23, 1
      %p130 = por %p128, %p129
      %p132 = scmp.ne.s32.totalorder %s117, %s131
      %p133 = scmp.eq.s32.totalorder %s23, 0
      %p134 = por %p132, %p133
      %s136 = sadd.s32 %s135, 1
      %p139 = scmp.eq.s32.totalorder %s17, 1
      %p140 = scmp.ne.s32.totalorder %s135, %s137
      %p141 = scmp.eq.s32.totalorder %s17, 0
      %p142 = por %p140, %p141
      %p143 = scmp.ne.s32.totalorder %s135, %s137
      %p144 = scmp.eq.s32.totalorder %s22, 1
      %p145 = por %p143, %p144
      %p146 = scmp.ne.s32.totalorder %s137, %s138
      %p147 = scmp.eq.s32.totalorder %s22, 0
      %p148 = por %p146, %p147
      %p149 = scmp.ne.s32.totalorder %s137, %s138
      %p150 = scmp.eq.s32.totalorder %s23, 1
      %p151 = por %p149, %p150
      %p153 = scmp.ne.s32.totalorder %s138, %s152
      %p154 = scmp.eq.s32.totalorder %s23, 0
      %p155 = por %p153, %p154
      %s157 = sadd.s32 %s156, 1
      %p160 = scmp.eq.s32.totalorder %s17, 1
      %p161 = scmp.ne.s32.totalorder %s156, %s158
      %p162 = scmp.eq.s32.totalorder %s17, 0
      %p163 = por %p161, %p162
      %p164 = scmp.ne.s32.totalorder %s156, %s158
      %p165 = scmp.eq.s32.totalorder %s22, 1
      %p166 = por %p164, %p165
      %p167 = scmp.ne.s32.totalorder %s158, %s159
      %p168 = scmp.eq.s32.totalorder %s22, 0
      %p169 = por %p167, %p168
      %p170 = scmp.ne.s32.totalorder %s158, %s159
      %p171 = scmp.eq.s32.totalorder %s23, 1
      %p172 = por %p170, %p171
      %p174 = scmp.ne.s32.totalorder %s159, %s173
      %p175 = scmp.eq.s32.totalorder %s23, 0
      %p176 = por %p174, %p175
      %s177 = ssub.s32 %s17, %s24
      %p178 = scmp.eq.s32.totalorder %s177, 0
      %s180 = sadd.s32 %s179, 1
      %s181 = scalar_select %p178, %s179, %s180
      %p184 = pneg %p178
      %p185 = scmp.eq.s32.totalorder %s17, 1
      %p186 = por %p184, %p185
      %p187 = scmp.ne.s32.totalorder %s179, %s182
      %p188 = scmp.eq.s32.totalorder %s17, 0
      %p189 = por %p187, %p188
      %p190 = scmp.ne.s32.totalorder %s179, %s182
      %p191 = scmp.eq.s32.totalorder %s22, 1
      %p192 = por %p190, %p191
      %p193 = scmp.ne.s32.totalorder %s182, %s183
      %p194 = scmp.eq.s32.totalorder %s22, 0
      %p195 = por %p193, %p194
      %p196 = scmp.ne.s32.totalorder %s182, %s183
      %p197 = scmp.eq.s32.totalorder %s23, 1
      %p198 = por %p196, %p197
      %p200 = scmp.ne.s32.totalorder %s183, %s199
      %p201 = scmp.eq.s32.totalorder %s23, 0
      %p202 = por %p200, %p201
      %p203 = scmp.le.s32.totalorder 1, %s17
      %p204 = scmp.lt.s32.totalorder %s17, 3
      %p205 = pnand %p203, %p204
      %p206 = pneg %p205
      // Predicated region
      $region9: #{tpu_custom_call.1} parent=5 // pred_check
        _
      $region10: #{tpu_custom_call.1} parent=5 // pred_check_branch
        %208 = sbr.rel (%p205) target = $region12
      $region11: #{tpu_custom_call.1} parent=5 // pred_region
        %s209 = ssub.s32 %s17, 1
        // Predicated region
        $region13: #{tpu_custom_call.1} parent=11 // pred_check
          %p210 = pneg %p64
        $region14: #{tpu_custom_call.1} parent=11 // pred_check_branch
          %212 = sbr.rel (%p210) target = $region16
        $region15: #{tpu_custom_call.1} parent=11 // pred_region
          %s214 = ssub.s32 512, 512
          %215 = vsyncadd [#allocation5], %s214
          %s216 = sshll.u32 [#allocation4], 4
          %s217 = int_to_ptr.vmem [resolvable:$true] %s216
          %222 = dma.hbm_to_vmem [thread:$0]  %s1, 512, %s217, [#allocation5], 64, 64, 4
        $region16: #{tpu_custom_call.1} parent=11 // pred_fallthru
          _
        // Predicated region
        $region17: #{tpu_custom_call.1} parent=11 // pred_check
          %p223 = pneg %p85
        $region18: #{tpu_custom_call.1} parent=11 // pred_check_branch
          %225 = sbr.rel (%p223) target = $region20
        $region19: #{tpu_custom_call.1} parent=11 // pred_region
          _
        $region20: #{tpu_custom_call.1} parent=11 // pred_fallthru
          _
        // Predicated region
        $region21: #{tpu_custom_call.1} parent=11 // pred_check
          %p226 = pneg %p106
        $region22: #{tpu_custom_call.1} parent=11 // pred_check_branch
          %228 = sbr.rel (%p226) target = $region24
        $region23: #{tpu_custom_call.1} parent=11 // pred_region
          _
        $region24: #{tpu_custom_call.1} parent=11 // pred_fallthru
          _
        // Predicated region
        $region25: #{tpu_custom_call.1} parent=11 // pred_check
          %p229 = pneg %p127
        $region26: #{tpu_custom_call.1} parent=11 // pred_check_branch
          %231 = sbr.rel (%p229) target = $region28
        $region27: #{tpu_custom_call.1} parent=11 // pred_region
          _
        $region28: #{tpu_custom_call.1} parent=11 // pred_fallthru
          _
        // Predicated region
        $region29: #{tpu_custom_call.1} parent=11 // pred_check
          %p232 = pneg %p148
        $region30: #{tpu_custom_call.1} parent=11 // pred_check_branch
          %234 = sbr.rel (%p232) target = $region32
        $region31: #{tpu_custom_call.1} parent=11 // pred_region
          _
        $region32: #{tpu_custom_call.1} parent=11 // pred_fallthru
          _
        // Predicated region
        $region33: #{tpu_custom_call.1} parent=11 // pred_check
          %p235 = pneg %p169
        $region34: #{tpu_custom_call.1} parent=11 // pred_check_branch
          %237 = sbr.rel (%p235) target = $region36
        $region35: #{tpu_custom_call.1} parent=11 // pred_region
          _
        $region36: #{tpu_custom_call.1} parent=11 // pred_fallthru
          _
      $region12: #{tpu_custom_call.1} parent=5 // pred_fallthru
        _
      %p238 = scmp.lt.s32.totalorder %s17, 2
      // Predicated region
      $region37: #{tpu_custom_call.1} parent=5 // pred_check
        %p239 = pneg %p238
      $region38: #{tpu_custom_call.1} parent=5 // pred_check_branch
        %241 = sbr.rel (%p239) target = $region40
      $region39: #{tpu_custom_call.1} parent=5 // pred_region
        // Predicated region
        $region41: #{tpu_custom_call.1} parent=39 // pred_check
          %p242 = pneg %p37
        $region42: #{tpu_custom_call.1} parent=39 // pred_check_branch
          %244 = sbr.rel (%p242) target = $region44
        $region43: #{tpu_custom_call.1} parent=39 // pred_region
          %s245 = sand.u32 %s27, 1
          %s246 = scalar_lea.sflag [#allocation3], %s245
          %s247 = sand.u32 %s27, 1
          %s248 = smul.addr %s247, 8
          %s249 = scalar_lea.vmem [#allocation2], %s248
          %s251 = ssub.s32 128, 128
          %252 = vsyncadd %s246, %s251
          %s253 = smul.addr %s17, 128
          %s254 = scalar_lea.hbm %s0, %s253
          %s256 = sshll.u32 %s249, 4
          %s257 = int_to_ptr.vmem [resolvable:$true] %s256
          %259 = dma.hbm_to_vmem [thread:$0]  %s254, 128, %s257, %s246
        $region44: #{tpu_custom_call.1} parent=39 // pred_fallthru
          _
      $region40: #{tpu_custom_call.1} parent=5 // pred_fallthru
        _
      %p260 = scmp.le.s32.totalorder 1, %s17
      %p261 = scmp.lt.s32.totalorder %s17, 3
      %p262 = pnand %p260, %p261
      %p263 = pneg %p262
      // Predicated region
      $region45: #{tpu_custom_call.1} parent=5 // pred_check
        _
      $region46: #{tpu_custom_call.1} parent=5 // pred_check_branch
        %265 = sbr.rel (%p262) target = $region48
      $region47: #{tpu_custom_call.1} parent=5 // pred_region
        %s266 = ssub.s32 %s17, 1
        %s267 = sand.u32 %s30, 1
        %s268 = scalar_lea.sflag [#allocation3], %s267
        %s269 = sand.u32 %s30, 1
        %s270 = smul.addr %s269, 8
        %s271 = scalar_lea.vmem [#allocation2], %s270
        // Predicated region
        $region49: #{tpu_custom_call.1} parent=47 // pred_check
          %p272 = pneg %p43
        $region50: #{tpu_custom_call.1} parent=47 // pred_check_branch
          %274 = sbr.rel (%p272) target = $region52
        $region51: #{tpu_custom_call.1} parent=47 // pred_region
          %275 = dma.done %s268, 128
        $region52: #{tpu_custom_call.1} parent=47 // pred_fallthru
          _
        // Predicated region
        $region53: #{tpu_custom_call.1} parent=47 // pred_check
          %p276 = pneg %p64
        $region54: #{tpu_custom_call.1} parent=47 // pred_check_branch
          %278 = sbr.rel (%p276) target = $region56
        $region55: #{tpu_custom_call.1} parent=47 // pred_region
          %279 = dma.done [#allocation5], 512
        $region56: #{tpu_custom_call.1} parent=47 // pred_fallthru
          _
        %s280 = sand.u32 %s30, 1
        %s281 = scalar_lea.sflag [#allocation3], %s280
        %s282 = sand.u32 %s30, 1
        %s283 = smul.addr %s282, 8
        %s284 = scalar_lea.vmem [#allocation2], %s283
        %p285 = pneg %p43
        %p286 = pneg %p40
        %p287 = pneg %p64
        %p288 = pneg %p61
        %p289 = pneg %p85
        %p290 = pneg %p82
        %p291 = pneg %p106
        %p292 = pneg %p103
        %p293 = pneg %p127
        %p294 = pneg %p124
        %p295 = pneg %p148
        %p296 = pneg %p145
        %p297 = pneg %p169
        %p298 = pneg %p166
        %p299 = pneg %p195
        %p300 = pneg %p192
        %p301 = scmp.lt.s32.totalorder %s22, 1
        %s302 = scalar_select %p301, %s22, 1
        %s303 = smul.addr %s302, 8
        %s304 = scalar_lea.vmem %s7, %s303
        %p305 = scmp.lt.s32.totalorder %s22, 1
        %s306 = scalar_select %p305, %s22, 1
        %s307 = smul.addr %s306, 8
        %s308 = scalar_lea.vmem %s7, %s307
        %v310 = vld [vmem:[%s271] sm:$0xff]
        %v311 = vpack.c.bf16 %v310, %v310
        %v312 = vld [vmem:[#allocation4] sm:$0xf]
        %v313 = vld [vmem:[#allocation4 + $0x4] sm:$0xf]
        %v314 = vld [vmem:[#allocation4 + $0x8] sm:$0xf]
        %v315 = vld [vmem:[#allocation4 + $0xc] sm:$0xf]
        %v316 = vld [vmem:[#allocation4 + $0x10] sm:$0xf]
        %v317 = vld [vmem:[#allocation4 + $0x14] sm:$0xf]
        %v318 = vld [vmem:[#allocation4 + $0x18] sm:$0xf]
        %v319 = vld [vmem:[#allocation4 + $0x1c] sm:$0xf]
        %v320 = vld [vmem:[%s2] sm:$0x1]
        %v322 = vlaneseq
        %v323 = vshrl.u32 %v322, 7
        %v324 = vsub.s32 0, %v323
        %v325 = vrot.slane %v320, %v324
        %v335 = vunpack.c.l.b16 %v312
        %v336 = vunpack.c.l.b16 %v313
        %v337 = vunpack.c.l.b16 %v314
        %v338 = vunpack.c.l.b16 %v315
        %v339 = vunpack.c.l.b16 %v316
        %v340 = vunpack.c.l.b16 %v317
        %v341 = vunpack.c.l.b16 %v318
        %v342 = vunpack.c.l.b16 %v319
        %v343 = vpack.c.b16 %v336, %v335
        %v344 = vpack.c.b16 %v338, %v337
        %v345 = vpack.c.b16 %v340, %v339
        %v346 = vpack.c.b16 %v342, %v341
        %vm351 = vcmask 523264
        %v353 = vsel %vm351, %v311, 0
        %355 = vmatprep.subr.bf16.mxu0 0
        %356 = vmatpush1.bf16.msra.mxu0 %v343
        %357 = vmatprep.subr.bf16.mxu0 0
        %358 = vmatpush1.bf16.msra.mxu0 %v344
        %359 = vmatprep.subr.bf16.mxu0 0
        %360 = vmatpush1.bf16.msra.mxu0 %v345
        %361 = vmatprep.subr.bf16.mxu0 0
        %362 = vmatpush1.bf16.msra.mxu0 %v346
        %363 = vmatprep.subr.bf16.mxu0 0
        %364 = vmatpush1.bf16.msra.mxu0 0
        %365 = vmatprep.subr.bf16.mxu0 0
        %366 = vmatpush1.bf16.msra.mxu0 0
        %367 = vmatprep.subr.bf16.mxu0 0
        %368 = vmatpush1.bf16.msra.mxu0 0
        %369 = vmatprep.subr.bf16.mxu0 0
        %370 = vmatpush1.bf16.msra.mxu0 0
        %371 = vmatprep.subr.bf16.mxu0 0
        %372 = vmatpush1.bf16.msra.mxu0 0
        %373 = vmatprep.subr.bf16.mxu0 0
        %374 = vmatpush1.bf16.msra.mxu0 0
        %375 = vmatprep.subr.bf16.mxu0 0
        %376 = vmatpush1.bf16.msra.mxu0 0
        %377 = vmatprep.subr.bf16.mxu0 0
        %378 = vmatpush1.bf16.msra.mxu0 0
        %379 = vmatprep.subr.bf16.mxu0 0
        %380 = vmatpush1.bf16.msra.mxu0 0
        %381 = vmatprep.subr.bf16.mxu0 0
        %382 = vmatpush1.bf16.msra.mxu0 0
        %383 = vmatprep.subr.bf16.mxu0 0
        %384 = vmatpush1.bf16.msra.mxu0 0
        %385 = vmatprep.subr.bf16.mxu0 0
        %386 = vmatpush1.bf16.msra.mxu0 0
        %387 = vmatprep.mubr.bf16.mxu0 0
        %388 = vmatmul.mubr.bf16.gmra.mrb[0].mxu0 %v353
        %v389 = vpop.f32.mrb[0].mxu0
        %v390 = vadd.f32 %v325, %v389
        %v391 = vpop.f32.mrb[0].mxu0
        %v392 = vpop.f32.mrb[0].mxu0
        %v393 = vpop.f32.mrb[0].mxu0
        %394 = vdwg.mxu0
        %v395 = vmul.f32 %v390, 0.5
        %v396 = vmul.f32 %v390, 0.044715
        %v397 = vmul.f32 %v396, %v390
        %v398 = vmul.f32 %v397, %v390
        %v399 = vadd.f32 %v390, %v398
        %v400 = vmul.f32 %v399, 0.7978846
        %v401 = vtanh.pop %v400
        %v402 = vadd.f32 %v401, 1.0
        %v403 = vmul.f32 %v395, %v402
        %v404 = vpack.c.bf16 %v403, %v403
        %v405 = vld [vmem:[%s3] sm:$0xf]
        %v406 = vld [vmem:[%s3 + $0x4] sm:$0xf]
        %v407 = vld [vmem:[%s3 + $0x8] sm:$0xf]
        %v408 = vld [vmem:[%s3 + $0xc] sm:$0xf]
        %v409 = vld [vmem:[%s3 + $0x10] sm:$0xf]
        %v410 = vld [vmem:[%s3 + $0x14] sm:$0xf]
        %v411 = vld [vmem:[%s3 + $0x18] sm:$0xf]
        %v412 = vld [vmem:[%s3 + $0x1c] sm:$0xf]
        %v413 = vld [vmem:[%s3 + $0x20] sm:$0xf]
        %v414 = vld [vmem:[%s3 + $0x24] sm:$0xf]
        %v415 = vld [vmem:[%s3 + $0x28] sm:$0xf]
        %v416 = vld [vmem:[%s3 + $0x2c] sm:$0xf]
        %v417 = vld [vmem:[%s3 + $0x30] sm:$0xf]
        %v418 = vld [vmem:[%s3 + $0x34] sm:$0xf]
        %v419 = vld [vmem:[%s3 + $0x38] sm:$0xf]
        %v420 = vld [vmem:[%s3 + $0x3c] sm:$0xf]
        %v421 = vld [vmem:[%s4] sm:$0x1]
        %v423 = vlaneseq
        %v424 = vshrl.u32 %v423, 7
        %v425 = vsub.s32 0, %v424
        %v426 = vrot.slane %v421, %v425
        %v444 = vunpack.c.l.b16 %v405
        %v445 = vunpack.c.l.b16 %v406
        %v446 = vunpack.c.l.b16 %v407
        %v447 = vunpack.c.l.b16 %v408
        %v448 = vunpack.c.l.b16 %v409
        %v449 = vunpack.c.l.b16 %v410
        %v450 = vunpack.c.l.b16 %v411
        %v451 = vunpack.c.l.b16 %v412
        %v452 = vunpack.c.l.b16 %v413
        %v453 = vunpack.c.l.b16 %v414
        %v454 = vunpack.c.l.b16 %v415
        %v455 = vunpack.c.l.b16 %v416
        %v456 = vunpack.c.l.b16 %v417
        %v457 = vunpack.c.l.b16 %v418
        %v458 = vunpack.c.l.b16 %v419
        %v459 = vunpack.c.l.b16 %v420
        %v460 = vpack.c.b16 %v445, %v444
        %v461 = vpack.c.b16 %v447, %v446
        %v462 = vpack.c.b16 %v449, %v448
        %v463 = vpack.c.b16 %v451, %v450
        %v464 = vpack.c.b16 %v453, %v452
        %v465 = vpack.c.b16 %v455, %v454
        %v466 = vpack.c.b16 %v457, %v456
        %v467 = vpack.c.b16 %v459, %v458
        %476 = vmatprep.subr.bf16.mxu0 0
        %477 = vmatpush1.bf16.msra.mxu0 %v460
        %478 = vmatprep.subr.bf16.mxu0 0
        %479 = vmatpush1.bf16.msra.mxu0 %v461
        %480 = vmatprep.subr.bf16.mxu0 0
        %481 = vmatpush1.bf16.msra.mxu0 %v462
        %482 = vmatprep.subr.bf16.mxu0 0
        %483 = vmatpush1.bf16.msra.mxu0 %v463
        %484 = vmatprep.subr.bf16.mxu0 0
        %485 = vmatpush1.bf16.msra.mxu0 %v464
        %486 = vmatprep.subr.bf16.mxu0 0
        %487 = vmatpush1.bf16.msra.mxu0 %v465
        %488 = vmatprep.subr.bf16.mxu0 0
        %489 = vmatpush1.bf16.msra.mxu0 %v466
        %490 = vmatprep.subr.bf16.mxu0 0
        %491 = vmatpush1.bf16.msra.mxu0 %v467
        %492 = vmatprep.subr.bf16.mxu0 0
        %493 = vmatpush1.bf16.msra.mxu0 0
        %494 = vmatprep.subr.bf16.mxu0 0
        %495 = vmatpush1.bf16.msra.mxu0 0
        %496 = vmatprep.subr.bf16.mxu0 0
        %497 = vmatpush1.bf16.msra.mxu0 0
        %498 = vmatprep.subr.bf16.mxu0 0
        %499 = vmatpush1.bf16.msra.mxu0 0
        %500 = vmatprep.subr.bf16.mxu0 0
        %501 = vmatpush1.bf16.msra.mxu0 0
        %502 = vmatprep.subr.bf16.mxu0 0
        %503 = vmatpush1.bf16.msra.mxu0 0
        %504 = vmatprep.subr.bf16.mxu0 0
        %505 = vmatpush1.bf16.msra.mxu0 0
        %506 = vmatprep.subr.bf16.mxu0 0
        %507 = vmatpush1.bf16.msra.mxu0 0
        %508 = vmatprep.mubr.bf16.mxu0 0
        %509 = vmatmul.mubr.bf16.gmra.mrb[0].mxu0 %v404
        %v510 = vpop.f32.mrb[0].mxu0
        %v511 = vadd.f32 %v426, %v510
        %v512 = vpop.f32.mrb[0].mxu0
        %v513 = vpop.f32.mrb[0].mxu0
        %v514 = vpop.f32.mrb[0].mxu0
        %515 = vdwg.mxu0
        %v516 = vmul.f32 %v511, 0.5
        %v517 = vmul.f32 %v511, 0.044715
        %v518 = vmul.f32 %v517, %v511
        %v519 = vmul.f32 %v518, %v511
        %v520 = vadd.f32 %v511, %v519
        %v521 = vmul.f32 %v520, 0.7978846
        %v522 = vtanh.pop %v521
        %v523 = vadd.f32 %v522, 1.0
        %v524 = vmul.f32 %v516, %v523
        %v525 = vpack.c.bf16 %v524, %v524
        %v526 = vld [vmem:[%s5] sm:$0xf]
        %v527 = vld [vmem:[%s5 + $0x4] sm:$0xf]
        %v528 = vld [vmem:[%s5 + $0x8] sm:$0xf]
        %v529 = vld [vmem:[%s5 + $0xc] sm:$0xf]
        %v530 = vld [vmem:[%s5 + $0x10] sm:$0xf]
        %v531 = vld [vmem:[%s5 + $0x14] sm:$0xf]
        %v532 = vld [vmem:[%s5 + $0x18] sm:$0xf]
        %v533 = vld [vmem:[%s5 + $0x1c] sm:$0xf]
        %v534 = vld [vmem:[%s5 + $0x20] sm:$0xf]
        %v535 = vld [vmem:[%s5 + $0x24] sm:$0xf]
        %v536 = vld [vmem:[%s5 + $0x28] sm:$0xf]
        %v537 = vld [vmem:[%s5 + $0x2c] sm:$0xf]
        %v538 = vld [vmem:[%s5 + $0x30] sm:$0xf]
        %v539 = vld [vmem:[%s5 + $0x34] sm:$0xf]
        %v540 = vld [vmem:[%s5 + $0x38] sm:$0xf]
        %v541 = vld [vmem:[%s5 + $0x3c] sm:$0xf]
        %v542 = vld [vmem:[%s6] sm:$0x1]
        %v544 = vlaneseq
        %v545 = vshrl.u32 %v544, 7
        %v546 = vsub.s32 0, %v545
        %v547 = vrot.slane %v542, %v546
        %v565 = vunpack.c.l.b16 %v526
        %v566 = vunpack.c.l.b16 %v527
        %v567 = vunpack.c.l.b16 %v528
        %v568 = vunpack.c.l.b16 %v529
        %v569 = vunpack.c.l.b16 %v530
        %v570 = vunpack.c.l.b16 %v531
        %v571 = vunpack.c.l.b16 %v532
        %v572 = vunpack.c.l.b16 %v533
        %v573 = vunpack.c.l.b16 %v534
        %v574 = vunpack.c.l.b16 %v535
        %v575 = vunpack.c.l.b16 %v536
        %v576 = vunpack.c.l.b16 %v537
        %v577 = vunpack.c.l.b16 %v538
        %v578 = vunpack.c.l.b16 %v539
        %v579 = vunpack.c.l.b16 %v540
        %v580 = vunpack.c.l.b16 %v541
        %v581 = vpack.c.b16 %v566, %v565
        %v582 = vpack.c.b16 %v568, %v567
        %v583 = vpack.c.b16 %v570, %v569
        %v584 = vpack.c.b16 %v572, %v571
        %v585 = vpack.c.b16 %v574, %v573
        %v586 = vpack.c.b16 %v576, %v575
        %v587 = vpack.c.b16 %v578, %v577
        %v588 = vpack.c.b16 %v580, %v579
        %597 = vmatprep.subr.bf16.mxu0 0
        %598 = vmatpush1.bf16.msra.mxu0 %v581
        %599 = vmatprep.subr.bf16.mxu0 0
        %600 = vmatpush1.bf16.msra.mxu0 %v582
        %601 = vmatprep.subr.bf16.mxu0 0
        %602 = vmatpush1.bf16.msra.mxu0 %v583
        %603 = vmatprep.subr.bf16.mxu0 0
        %604 = vmatpush1.bf16.msra.mxu0 %v584
        %605 = vmatprep.subr.bf16.mxu0 0
        %606 = vmatpush1.bf16.msra.mxu0 %v585
        %607 = vmatprep.subr.bf16.mxu0 0
        %608 = vmatpush1.bf16.msra.mxu0 %v586
        %609 = vmatprep.subr.bf16.mxu0 0
        %610 = vmatpush1.bf16.msra.mxu0 %v587
        %611 = vmatprep.subr.bf16.mxu0 0
        %612 = vmatpush1.bf16.msra.mxu0 %v588
        %613 = vmatprep.subr.bf16.mxu0 0
        %614 = vmatpush1.bf16.msra.mxu0 0
        %615 = vmatprep.subr.bf16.mxu0 0
        %616 = vmatpush1.bf16.msra.mxu0 0
        %617 = vmatprep.subr.bf16.mxu0 0
        %618 = vmatpush1.bf16.msra.mxu0 0
        %619 = vmatprep.subr.bf16.mxu0 0
        %620 = vmatpush1.bf16.msra.mxu0 0
        %621 = vmatprep.subr.bf16.mxu0 0
        %622 = vmatpush1.bf16.msra.mxu0 0
        %623 = vmatprep.subr.bf16.mxu0 0
        %624 = vmatpush1.bf16.msra.mxu0 0
        %625 = vmatprep.subr.bf16.mxu0 0
        %626 = vmatpush1.bf16.msra.mxu0 0
        %627 = vmatprep.subr.bf16.mxu0 0
        %628 = vmatpush1.bf16.msra.mxu0 0
        %629 = vmatprep.mubr.bf16.mxu0 0
        %630 = vmatmul.mubr.bf16.gmra.mrb[0].mxu0 %v525
        %v631 = vpop.f32.mrb[0].mxu0
        %v632 = vadd.f32 %v547, %v631
        %v633 = vpop.f32.mrb[0].mxu0
        %v634 = vpop.f32.mrb[0].mxu0
        %v635 = vpop.f32.mrb[0].mxu0
        %636 = vdwg.mxu0
        %vm637 = vcmask 64512
        %638 = vst.msk [vmem:[%s308] sm:$0xff] %vm637, %v632
        %p639 = scmp.lt.s32.totalorder %s22, 1
        %s640 = scalar_select %p639, %s22, 1
        %s641 = smul.addr %s640, 8
        %s642 = scalar_lea.vmem %s7, %s641
        // Predicated region
        $region57: #{tpu_custom_call.1} parent=47 // pred_check
          %p643 = pneg %p192
        $region58: #{tpu_custom_call.1} parent=47 // pred_check_branch
          %645 = sbr.rel (%p643) target = $region60
        $region59: #{tpu_custom_call.1} parent=47 // pred_region
          _
        $region60: #{tpu_custom_call.1} parent=47 // pred_fallthru
          _
      $region48: #{tpu_custom_call.1} parent=5 // pred_fallthru
        _
      %p646 = scmp.le.s32.totalorder 2, %s17
      // Predicated region
      $region61: #{tpu_custom_call.1} parent=5 // pred_check
        %p647 = pneg %p646
      $region62: #{tpu_custom_call.1} parent=5 // pred_check_branch
        %649 = sbr.rel (%p647) target = $region64
      $region63: #{tpu_custom_call.1} parent=5 // pred_region
        %s650 = ssub.s32 %s17, 2
        // Predicated region
        $region65: #{tpu_custom_call.1} parent=63 // pred_check
          %p651 = pneg %p198
        $region66: #{tpu_custom_call.1} parent=63 // pred_check_branch
          %653 = sbr.rel (%p651) target = $region68
        $region67: #{tpu_custom_call.1} parent=63 // pred_region
          %p654 = scmp.lt.s32.totalorder %s23, 1
          %s655 = scalar_select %p654, %s23, 1
          %s656 = smul.addr %s655, 8
          %s657 = scalar_lea.vmem %s7, %s656
        $region68: #{tpu_custom_call.1} parent=63 // pred_fallthru
          _
      $region64: #{tpu_custom_call.1} parent=5 // pred_fallthru
        _
    $region6: #{tpu_custom_call.1} parent=1 // loop_footer
      %s21 = sadd.s32 1, %s17
    $region7: #{tpu_custom_call.1} parent=1 // loop_footer_branch
      %16 = sbr.rel target = $region3
    $region8: #{tpu_custom_call.1} parent=1 // loop_exit
      _
    %658 = vsyncpa [#allocation3], 1
    %s659 = scalar_lea.sflag [#allocation3], 1
    %660 = vsyncpa %s659, 1
    %661 = vsyncpa [#allocation5], 1

</llo_original>
